<compile_context>
chip_gen: v6e
topology: v6e:2x2x1
jax: 0.10.0
libtpu: 0.0.40
codegen_flags: <defaults>
</compile_context>

<pallas_src>
import functools

import jax
import jax.numpy as jnp
from jax.experimental import pallas as pl
from jax.experimental.pallas import tpu as pltpu

# ---------------- problem sizes (small, consistent with a CNN classifier) ----
B, CIN, H, W = 2, 4, 16, 16
KH = KW = 3
K = KH * KW * CIN          # merged im2col contraction dim = 36
COUT = 32                  # conv output channels / feature dim
NUM_CLASSES = 10           # classifier logits
N_PAD = 128                # logits dim padded to a full lane width (unmasked stores)


# ---------------- Pallas kernel: fused conv(matmul)+ReLU+GAP(matmul)+linear --
def _forward_kernel(patches_ref, wc_ref, bc_ref, wl_ref, bl_ref, o_ref, *, hw):
    # conv as ONE merged-K matmul: [HW, 36](bf16) @ [36, COUT](bf16) -> f32 acc
    conv = jnp.dot(patches_ref[0], wc_ref[...],
                   preferred_element_type=jnp.float32)
    # bias + ReLU kept in f32 (v5e VPU has no bf16 path)
    conv = jnp.maximum(conv + bc_ref[...], 0.0)
    # global-average-pool as an MXU matmul: (1, HW) @ (HW, COUT); the 1/hw scale
    # is folded into the pooling row so no extra VPU pass is needed.
    pool = jnp.full((1, hw), 1.0 / hw, dtype=jnp.float32)
    feat = jnp.dot(pool, conv, preferred_element_type=jnp.float32)     # [1, COUT]
    # classifier matmul (bf16 in, f32 accumulate) + f32 bias
    logits = jnp.dot(feat.astype(jnp.bfloat16), wl_ref[...],
                     preferred_element_type=jnp.float32) + bl_ref[...]
    o_ref[0] = logits.astype(o_ref.dtype)                               # [1, N_PAD]


# ---------------- one-time parameter preparation (hoisted off the hot path) --
def prepare_params(conv_w, conv_b, fc_w, fc_b):
    """Run ONCE at model load. Moves all layout transforms / dtype casts off the
    per-call path (they are fixed overhead otherwise)."""
    # torch Conv2d weight [Cout, Cin, KH, KW] -> tap-major im2col weight
    # [(kh*KW+kw)*CIN + cin, Cout], matching the concatenate order of the taps.
    wc = jnp.transpose(conv_w, (2, 3, 1, 0)).reshape(K, COUT).astype(jnp.bfloat16)
    bc = conv_b.reshape(1, COUT).astype(jnp.float32)
    # torch Linear weight [NUM_CLASSES, COUT] -> [COUT, N_PAD], zero-padded to a
    # lane-dense 128-wide output so the final store is an unmasked vst.
    wl = jnp.zeros((COUT, N_PAD), jnp.float32).at[:, :NUM_CLASSES].set(fc_w.T)
    wl = wl.astype(jnp.bfloat16)
    bl = jnp.zeros((1, N_PAD), jnp.float32).at[:, :NUM_CLASSES].set(fc_b)
    return wc, bc, wl, bl


# ---------------- forward pass ------------------------------------------------
@jax.jit
def continual_learner_forward(x_nchw, wc, bc, wl, bl):
    """x_nchw: [B, Cin, H, W] float32 (PyTorch layout). Returns logits [B, NUM_CLASSES]."""
    # Lightweight im2col: single concatenate of 9 shifted views (no stack+reshape
    # relayout on the big tensor); K ordering (kh*KW+kw)*CIN + cin matches wc.
    x = jnp.transpose(x_nchw, (0, 2, 3, 1))                         # NHWC
    xp = jnp.pad(x, ((0, 0), (1, 1), (1, 1), (0, 0)))               # pad=1
    taps = [xp[:, kh:kh + H, kw:kw + W, :]                          # each [B,H,W,CIN]
            for kh in range(KH) for kw in range(KW)]
    patches = jnp.concatenate(taps, axis=-1)                        # [B,H,W,K]
    patches = patches.reshape(B, H * W, K).astype(jnp.bfloat16)     # [B,HW,K] bf16

    out = pl.pallas_call(
        functools.partial(_forward_kernel, hw=H * W),
        out_shape=jax.ShapeDtypeStruct((B, 1, N_PAD), jnp.float32),
        grid=(B,),  # one grid step per sample -> sharded across TCs on v7x
        in_specs=[
            pl.BlockSpec((1, H * W, K), lambda b: (b, 0, 0)),       # per-sample patches
            pl.BlockSpec((K, COUT), lambda b: (0, 0)),              # conv weight (bf16)
            pl.BlockSpec((1, COUT), lambda b: (0, 0)),              # conv bias  (f32)
            pl.BlockSpec((COUT, N_PAD), lambda b: (0, 0)),          # fc weight  (bf16)
            pl.BlockSpec((1, N_PAD), lambda b: (0, 0)),             # fc bias    (f32)
        ],
        out_specs=pl.BlockSpec((1, 1, N_PAD), lambda b: (b, 0, 0)),
        compiler_params=pltpu.CompilerParams(dimension_semantics=("parallel",)),
    )(patches, wc, bc, wl, bl)

    return out[:, 0, :NUM_CLASSES]                                  # [B, NUM_CLASSES]


# ---------------- deterministic parameter init + run --------------------------
if __name__ == "__main__":
    key = jax.random.PRNGKey(0)
    kx, kcw, kcb, klw, klb = jax.random.split(key, 5)

    x = jax.random.normal(kx, (B, CIN, H, W), dtype=jnp.float32)            # NCHW input
    conv_w = jax.random.normal(kcw, (COUT, CIN, KH, KW), dtype=jnp.float32) * 0.1
    conv_b = jax.random.normal(kcb, (COUT,), dtype=jnp.float32) * 0.1
    fc_w = jax.random.normal(klw, (NUM_CLASSES, COUT), dtype=jnp.float32) * 0.1
    fc_b = jax.random.normal(klb, (NUM_CLASSES,), dtype=jnp.float32) * 0.1

    # one-time weight preparation (layout transforms hoisted off the hot path)
    wc, bc, wl, bl = prepare_params(conv_w, conv_b, fc_w, fc_b)

    logits = continual_learner_forward(x, wc, bc, wl, bl)
    jax.block_until_ready(logits)

    # sanity check against a pure-f32 JAX reference of the same model.
    # Matmul inputs are bf16 (f32 accumulation), so use a bf16-appropriate
    # tolerance; the pure-f32 variant of this kernel holds 1e-4.
    ref_conv = jax.lax.conv_general_dilated(
        x, conv_w, window_strides=(1, 1), padding="SAME",
        dimension_numbers=("NCHW", "OIHW", "NCHW"))
    ref_feat = jnp.maximum(ref_conv + conv_b[None, :, None, None], 0.0).mean(axis=(2, 3))
    ref_logits = ref_feat @ fc_w.T + fc_b
    assert logits.shape == (B, NUM_CLASSES)
    assert jnp.allclose(logits, ref_logits, atol=1e-2, rtol=1e-2)

    print("KERNEL_OK")
</pallas_src>

<mosaic_0001>
module attributes {stable_mosaic.version = 11 : i64} {
  func.func @_forward_kernel(%arg0: i32, %arg1: memref<1x256x36xbf16, #tpu.memory_space<vmem>>, %arg2: memref<36x32xbf16, #tpu.memory_space<vmem>>, %arg3: memref<1x32xf32, #tpu.memory_space<vmem>>, %arg4: memref<32x128xbf16, #tpu.memory_space<vmem>>, %arg5: memref<1x128xf32, #tpu.memory_space<vmem>>, %arg6: memref<1x1x128xf32, #tpu.memory_space<vmem>>) attributes {dimension_semantics = [#tpu.dimension_semantics<parallel>], iteration_bounds = array<i64: 2>, scalar_prefetch = 0 : i64, scratch_operands = 0 : i64, tpu.core_type = #tpu.core_type<tc>, window_params = [{transform_indices = @transform_0, window_bounds = array<i64: 1, 256, 36>}, {pipeline_mode = #tpu.pipeline_mode<synchronous>, transform_indices = @transform_1, window_bounds = array<i64: 36, 32>}, {pipeline_mode = #tpu.pipeline_mode<synchronous>, transform_indices = @transform_2, window_bounds = array<i64: 1, 32>}, {pipeline_mode = #tpu.pipeline_mode<synchronous>, transform_indices = @transform_3, window_bounds = array<i64: 32, 128>}, {pipeline_mode = #tpu.pipeline_mode<synchronous>, transform_indices = @transform_4, window_bounds = array<i64: 1, 128>}, {transform_indices = @transform_5, window_bounds = array<i64: 1, 1, 128>}]} {
    %c0 = arith.constant 0 : index
    %c0_0 = arith.constant 0 : index
    %c0_1 = arith.constant 0 : index
    %0 = vector.load %arg1[%c0, %c0_0, %c0_1] : memref<1x256x36xbf16, #tpu.memory_space<vmem>>, vector<1x256x36xbf16>
    %1 = vector.shape_cast %0 : vector<1x256x36xbf16> to vector<256x36xbf16>
    %c0_2 = arith.constant 0 : index
    %c0_3 = arith.constant 0 : index
    %2 = vector.load %arg2[%c0_2, %c0_3] : memref<36x32xbf16, #tpu.memory_space<vmem>>, vector<36x32xbf16>
    %cst = arith.constant dense<0.000000e+00> : vector<256x32xf32>
    %3 = tpu.matmul %1, %2, %cst {dimension_numbers = #tpu.dot_dimension_numbers<[1], [0], [0], [1], [0, 0, 1, 1], [], []>} : vector<256x36xbf16>, vector<36x32xbf16>, vector<256x32xf32> -> vector<256x32xf32>
    %c0_4 = arith.constant 0 : index
    %c0_5 = arith.constant 0 : index
    %4 = vector.load %arg3[%c0_4, %c0_5] : memref<1x32xf32, #tpu.memory_space<vmem>>, vector<1x32xf32>
    %5 = vector.broadcast %4 : vector<1x32xf32> to vector<256x32xf32>
    %6 = arith.addf %3, %5 : vector<256x32xf32>
    %cst_6 = arith.constant 0.000000e+00 : f32
    %7 = vector.broadcast %cst_6 : f32 to vector<256x32xf32>
    %8 = arith.maximumf %6, %7 : vector<256x32xf32>
    %cst_7 = arith.constant 3.906250e-03 : f32
    %9 = vector.broadcast %cst_7 : f32 to vector<1x256xf32>
    %cst_8 = arith.constant dense<0.000000e+00> : vector<1x32xf32>
    %10 = tpu.matmul %9, %8, %cst_8 {dimension_numbers = #tpu.dot_dimension_numbers<[1], [0], [0], [1], [0, 0, 1, 1], [], []>} : vector<1x256xf32>, vector<256x32xf32>, vector<1x32xf32> -> vector<1x32xf32>
    %11 = arith.truncf %10 : vector<1x32xf32> to vector<1x32xbf16>
    %c0_9 = arith.constant 0 : index
    %c0_10 = arith.constant 0 : index
    %12 = vector.load %arg4[%c0_9, %c0_10] : memref<32x128xbf16, #tpu.memory_space<vmem>>, vector<32x128xbf16>
    %cst_11 = arith.constant dense<0.000000e+00> : vector<1x128xf32>
    %13 = tpu.matmul %11, %12, %cst_11 {dimension_numbers = #tpu.dot_dimension_numbers<[1], [0], [0], [1], [0, 0, 1, 1], [], []>} : vector<1x32xbf16>, vector<32x128xbf16>, vector<1x128xf32> -> vector<1x128xf32>
    %c0_12 = arith.constant 0 : index
    %c0_13 = arith.constant 0 : index
    %14 = vector.load %arg5[%c0_12, %c0_13] : memref<1x128xf32, #tpu.memory_space<vmem>>, vector<1x128xf32>
    %15 = arith.addf %13, %14 : vector<1x128xf32>
    %c0_14 = arith.constant 0 : index
    %c0_15 = arith.constant 0 : index
    %c0_16 = arith.constant 0 : index
    %16 = vector.load %arg6[%c0_14, %c0_15, %c0_16] : memref<1x1x128xf32, #tpu.memory_space<vmem>>, vector<1x1x128xf32>
    %17 = vector.shape_cast %16 : vector<1x1x128xf32> to vector<1x128xf32>
    %18 = vector.shape_cast %15 : vector<1x128xf32> to vector<1x1x128xf32>
    tpu.vector_store %arg6[%c0_14, %c0_15, %c0_16], %18 {strides = array<i32>} : memref<1x1x128xf32, #tpu.memory_space<vmem>>, vector<1x1x128xf32>,
    return
  }
  func.func @transform_0(%arg0: i32) -> (i32, i32, i32) {
    %c0_i32 = arith.constant 0 : i32
    %c0_i32_0 = arith.constant 0 : i32
    %c0_i32_1 = arith.constant 0 : i32
    return %arg0, %c0_i32, %c0_i32_0 : i32, i32, i32
  }
  func.func @transform_1(%arg0: i32) -> (i32, i32) {
    %c0_i32 = arith.constant 0 : i32
    %c0_i32_0 = arith.constant 0 : i32
    %c0_i32_1 = arith.constant 0 : i32
    return %c0_i32, %c0_i32_0 : i32, i32
  }
  func.func @transform_2(%arg0: i32) -> (i32, i32) {
    %c0_i32 = arith.constant 0 : i32
    %c0_i32_0 = arith.constant 0 : i32
    %c0_i32_1 = arith.constant 0 : i32
    return %c0_i32, %c0_i32_0 : i32, i32
  }
  func.func @transform_3(%arg0: i32) -> (i32, i32) {
    %c0_i32 = arith.constant 0 : i32
    %c0_i32_0 = arith.constant 0 : i32
    %c0_i32_1 = arith.constant 0 : i32
    return %c0_i32, %c0_i32_0 : i32, i32
  }
  func.func @transform_4(%arg0: i32) -> (i32, i32) {
    %c0_i32 = arith.constant 0 : i32
    %c0_i32_0 = arith.constant 0 : i32
    %c0_i32_1 = arith.constant 0 : i32
    return %c0_i32, %c0_i32_0 : i32, i32
  }
  func.func @transform_5(%arg0: i32) -> (i32, i32, i32) {
    %c0_i32 = arith.constant 0 : i32
    %c0_i32_0 = arith.constant 0 : i32
    %c0_i32_1 = arith.constant 0 : i32
    return %arg0, %c0_i32, %c0_i32_0 : i32, i32, i32
  }
}

</mosaic_0001>

<llo_original>
// kernel: continual_learner_forward.1
$region0: #{continual_learner_forward.1}
  #allocation0 [shape = 'u32[]', space=smem, size = 0x4, offset = 0x4, fixed_abs, tag = 'smem constant byte address 0x4 - core index']
  #allocation1 [shape = 'u32[144,128]{1,0:T(1,128)}', space=vmem, size = 0x12000, scoped, tag = 'internal scratch']
  %s0 = inlined_call_operand.vmem [shape: bf16[2,256,36], index: 0, kind: input, shape index: {}]
  %s1 = inlined_call_operand.vmem [shape: bf16[36,32], index: 1, kind: input, shape index: {}]
  %s2 = inlined_call_operand.vmem [shape: f32[1,32], index: 2, kind: input, shape index: {}]
  %s3 = inlined_call_operand.vmem [shape: bf16[32,128], index: 3, kind: input, shape index: {}]
  %s4 = inlined_call_operand.vmem [shape: f32[1,128], index: 4, kind: input, shape index: {}]
  %s5 = inlined_call_operand.hbm [shape: f32[2,1,128], index: 5, kind: output, shape index: {}]
  %s6 = sld [smem:[#allocation0]]
  $region53: #{continual_learner_forward.1} parent=0
    _
  %s8 = ssub.s32 1, %s6
  %s9 = scalar_select 0, %s8, %s6
  $region1: #{continual_learner_forward.1} parent=0
    #allocation2 [shape = 'u8[1024]{0}', space=vmem, size = 0x400, scoped, tag = 'output window, operand 0']
    #allocation3 [shape = 's32[2]{0}', space=sflag, size = 0x8, scoped, tag = 'scoped memory for continual_learner_forward.1']
    %10 = vsyncpa [#allocation3], 0
    %s11 = scalar_lea.sflag [#allocation3], 1
    %12 = vsyncpa %s11, 0
    loop: start=0, step=1, limit=4
    $region2: #{continual_learner_forward.1} parent=1 // loop_pre_header
      _
    $region3: #{continual_learner_forward.1} parent=1 // loop_header
      %s14 = sphi 0, %s18
      %p15 = scmp.ge.s32.totalorder %s14, 4
      %s24 = sphi 0, %s26
      %s27 = sphi 0, %s24
      %s28 = sphi 0, %s27
      %s44 = sphi 0, %s28
      %s48 = sphi 0, %s48
      %s50 = sphi 0, %s48
      %s51 = sphi 0, %s50
      %s65 = sphi 0, %s51
      %s69 = sphi 0, %s69
      %s71 = sphi 0, %s69
      %s72 = sphi 0, %s71
      %s86 = sphi 0, %s72
      %s90 = sphi 0, %s90
      %s92 = sphi 0, %s90
      %s93 = sphi 0, %s92
      %s107 = sphi 0, %s93
      %s111 = sphi 0, %s111
      %s113 = sphi 0, %s111
      %s114 = sphi 0, %s113
      %s128 = sphi 0, %s114
      %s134 = sphi 0, %s136
      %s137 = sphi 0, %s134
      %s138 = sphi 0, %s137
      %s154 = sphi 0, %s138
    $region4: #{continual_learner_forward.1} parent=1 // loop_header_branch
      %17 = sbr.rel (%p15) target = $region8
    $region5: #{continual_learner_forward.1} parent=1 // loop_body
      %s19 = ssub.s32 %s14, 1
      %s20 = ssub.s32 %s14, 2
      %s21 = sadd.s32 %s14, 1
      %s22 = ssub.s32 %s14, %s21
      %p23 = scmp.eq.s32.totalorder %s22, 0
      %s25 = sadd.s32 %s24, 1
      %s26 = scalar_select %p23, %s24, %s25
      %p29 = pneg %p23
      %p30 = scmp.eq.s32.totalorder %s14, 1
      %p31 = por %p29, %p30
      %p32 = scmp.ne.s32.totalorder %s24, %s27
      %p33 = scmp.eq.s32.totalorder %s14, 0
      %p34 = por %p32, %p33
      %p35 = scmp.ne.s32.totalorder %s24, %s27
      %p36 = scmp.eq.s32.totalorder %s19, 1
      %p37 = por %p35, %p36
      %p38 = scmp.ne.s32.totalorder %s27, %s28
      %p39 = scmp.eq.s32.totalorder %s19, 0
      %p40 = por %p38, %p39
      %p41 = scmp.ne.s32.totalorder %s27, %s28
      %p42 = scmp.eq.s32.totalorder %s20, 1
      %p43 = por %p41, %p42
      %p45 = scmp.ne.s32.totalorder %s28, %s44
      %p46 = scmp.eq.s32.totalorder %s20, 0
      %p47 = por %p45, %p46
      %s49 = sadd.s32 %s48, 1
      %p52 = scmp.eq.s32.totalorder %s14, 1
      %p53 = scmp.ne.s32.totalorder %s48, %s50
      %p54 = scmp.eq.s32.totalorder %s14, 0
      %p55 = por %p53, %p54
      %p56 = scmp.ne.s32.totalorder %s48, %s50
      %p57 = scmp.eq.s32.totalorder %s19, 1
      %p58 = por %p56, %p57
      %p59 = scmp.ne.s32.totalorder %s50, %s51
      %p60 = scmp.eq.s32.totalorder %s19, 0
      %p61 = por %p59, %p60
      %p62 = scmp.ne.s32.totalorder %s50, %s51
      %p63 = scmp.eq.s32.totalorder %s20, 1
      %p64 = por %p62, %p63
      %p66 = scmp.ne.s32.totalorder %s51, %s65
      %p67 = scmp.eq.s32.totalorder %s20, 0
      %p68 = por %p66, %p67
      %s70 = sadd.s32 %s69, 1
      %p73 = scmp.eq.s32.totalorder %s14, 1
      %p74 = scmp.ne.s32.totalorder %s69, %s71
      %p75 = scmp.eq.s32.totalorder %s14, 0
      %p76 = por %p74, %p75
      %p77 = scmp.ne.s32.totalorder %s69, %s71
      %p78 = scmp.eq.s32.totalorder %s19, 1
      %p79 = por %p77, %p78
      %p80 = scmp.ne.s32.totalorder %s71, %s72
      %p81 = scmp.eq.s32.totalorder %s19, 0
      %p82 = por %p80, %p81
      %p83 = scmp.ne.s32.totalorder %s71, %s72
      %p84 = scmp.eq.s32.totalorder %s20, 1
      %p85 = por %p83, %p84
      %p87 = scmp.ne.s32.totalorder %s72, %s86
      %p88 = scmp.eq.s32.totalorder %s20, 0
      %p89 = por %p87, %p88
      %s91 = sadd.s32 %s90, 1
      %p94 = scmp.eq.s32.totalorder %s14, 1
      %p95 = scmp.ne.s32.totalorder %s90, %s92
      %p96 = scmp.eq.s32.totalorder %s14, 0
      %p97 = por %p95, %p96
      %p98 = scmp.ne.s32.totalorder %s90, %s92
      %p99 = scmp.eq.s32.totalorder %s19, 1
      %p100 = por %p98, %p99
      %p101 = scmp.ne.s32.totalorder %s92, %s93
      %p102 = scmp.eq.s32.totalorder %s19, 0
      %p103 = por %p101, %p102
      %p104 = scmp.ne.s32.totalorder %s92, %s93
      %p105 = scmp.eq.s32.totalorder %s20, 1
      %p106 = por %p104, %p105
      %p108 = scmp.ne.s32.totalorder %s93, %s107
      %p109 = scmp.eq.s32.totalorder %s20, 0
      %p110 = por %p108, %p109
      %s112 = sadd.s32 %s111, 1
      %p115 = scmp.eq.s32.totalorder %s14, 1
      %p116 = scmp.ne.s32.totalorder %s111, %s113
      %p117 = scmp.eq.s32.totalorder %s14, 0
      %p118 = por %p116, %p117
      %p119 = scmp.ne.s32.totalorder %s111, %s113
      %p120 = scmp.eq.s32.totalorder %s19, 1
      %p121 = por %p119, %p120
      %p122 = scmp.ne.s32.totalorder %s113, %s114
      %p123 = scmp.eq.s32.totalorder %s19, 0
      %p124 = por %p122, %p123
      %p125 = scmp.ne.s32.totalorder %s113, %s114
      %p126 = scmp.eq.s32.totalorder %s20, 1
      %p127 = por %p125, %p126
      %p129 = scmp.ne.s32.totalorder %s114, %s128
      %p130 = scmp.eq.s32.totalorder %s20, 0
      %p131 = por %p129, %p130
      %s132 = ssub.s32 %s14, %s21
      %p133 = scmp.eq.s32.totalorder %s132, 0
      %s135 = sadd.s32 %s134, 1
      %s136 = scalar_select %p133, %s134, %s135
      %p139 = pneg %p133
      %p140 = scmp.eq.s32.totalorder %s14, 1
      %p141 = por %p139, %p140
      %p142 = scmp.ne.s32.totalorder %s134, %s137
      %p143 = scmp.eq.s32.totalorder %s14, 0
      %p144 = por %p142, %p143
      %p145 = scmp.ne.s32.totalorder %s134, %s137
      %p146 = scmp.eq.s32.totalorder %s19, 1
      %p147 = por %p145, %p146
      %p148 = scmp.ne.s32.totalorder %s137, %s138
      %p149 = scmp.eq.s32.totalorder %s19, 0
      %p150 = por %p148, %p149
      %p151 = scmp.ne.s32.totalorder %s137, %s138
      %p152 = scmp.eq.s32.totalorder %s20, 1
      %p153 = por %p151, %p152
      %p155 = scmp.ne.s32.totalorder %s138, %s154
      %p156 = scmp.eq.s32.totalorder %s20, 0
      %p157 = por %p155, %p156
      %p158 = scmp.le.s32.totalorder 1, %s14
      %p159 = scmp.lt.s32.totalorder %s14, 3
      %p160 = pnand %p158, %p159
      %p161 = pneg %p160
      // Predicated region
      $region9: #{continual_learner_forward.1} parent=5 // pred_check
        _
      $region10: #{continual_learner_forward.1} parent=5 // pred_check_branch
        %163 = sbr.rel (%p160) target = $region12
      $region11: #{continual_learner_forward.1} parent=5 // pred_region
        %s164 = ssub.s32 %s14, 1
        // Predicated region
        $region13: #{continual_learner_forward.1} parent=11 // pred_check
          %p165 = pneg %p61
        $region14: #{continual_learner_forward.1} parent=11 // pred_check_branch
          %167 = sbr.rel (%p165) target = $region16
        $region15: #{continual_learner_forward.1} parent=11 // pred_region
          _
        $region16: #{continual_learner_forward.1} parent=11 // pred_fallthru
          _
        // Predicated region
        $region17: #{continual_learner_forward.1} parent=11 // pred_check
          %p168 = pneg %p82
        $region18: #{continual_learner_forward.1} parent=11 // pred_check_branch
          %170 = sbr.rel (%p168) target = $region20
        $region19: #{continual_learner_forward.1} parent=11 // pred_region
          _
        $region20: #{continual_learner_forward.1} parent=11 // pred_fallthru
          _
        // Predicated region
        $region21: #{continual_learner_forward.1} parent=11 // pred_check
          %p171 = pneg %p103
        $region22: #{continual_learner_forward.1} parent=11 // pred_check_branch
          %173 = sbr.rel (%p171) target = $region24
        $region23: #{continual_learner_forward.1} parent=11 // pred_region
          _
        $region24: #{continual_learner_forward.1} parent=11 // pred_fallthru
          _
        // Predicated region
        $region25: #{continual_learner_forward.1} parent=11 // pred_check
          %p174 = pneg %p124
        $region26: #{continual_learner_forward.1} parent=11 // pred_check_branch
          %176 = sbr.rel (%p174) target = $region28
        $region27: #{continual_learner_forward.1} parent=11 // pred_region
          _
        $region28: #{continual_learner_forward.1} parent=11 // pred_fallthru
          _
      $region12: #{continual_learner_forward.1} parent=5 // pred_fallthru
        _
      %p177 = scmp.lt.s32.totalorder %s14, 2
      // Predicated region
      $region29: #{continual_learner_forward.1} parent=5 // pred_check
        %p178 = pneg %p177
      $region30: #{continual_learner_forward.1} parent=5 // pred_check_branch
        %180 = sbr.rel (%p178) target = $region32
      $region31: #{continual_learner_forward.1} parent=5 // pred_region
        // Predicated region
        $region33: #{continual_learner_forward.1} parent=31 // pred_check
          %p181 = pneg %p34
        $region34: #{continual_learner_forward.1} parent=31 // pred_check_branch
          %183 = sbr.rel (%p181) target = $region36
        $region35: #{continual_learner_forward.1} parent=31 // pred_region
          %p184 = scmp.lt.s32.totalorder %s14, 1
          %s185 = scalar_select %p184, %s14, 1
          %s186 = smul.addr %s185, 32
          %s187 = smul.addr %s186, 4
          %s188 = scalar_lea.vmem %s0, %s187
        $region36: #{continual_learner_forward.1} parent=31 // pred_fallthru
          _
      $region32: #{continual_learner_forward.1} parent=5 // pred_fallthru
        _
      %p189 = scmp.le.s32.totalorder 1, %s14
      %p190 = scmp.lt.s32.totalorder %s14, 3
      %p191 = pnand %p189, %p190
      %p192 = pneg %p191
      // Predicated region
      $region37: #{continual_learner_forward.1} parent=5 // pred_check
        _
      $region38: #{continual_learner_forward.1} parent=5 // pred_check_branch
        %194 = sbr.rel (%p191) target = $region40
      $region39: #{continual_learner_forward.1} parent=5 // pred_region
        %s195 = ssub.s32 %s14, 1
        %p196 = scmp.lt.s32.totalorder %s19, 1
        %s197 = scalar_select %p196, %s19, 1
        %s198 = smul.addr %s197, 32
        %s199 = smul.addr %s198, 4
        %s200 = scalar_lea.vmem %s0, %s199
        %p201 = pneg %p40
        %p202 = pneg %p37
        %p203 = pneg %p61
        %p204 = pneg %p58
        %p205 = pneg %p82
        %p206 = pneg %p79
        %p207 = pneg %p103
        %p208 = pneg %p100
        %p209 = pneg %p124
        %p210 = pneg %p121
        %p211 = pneg %p150
        %p212 = pneg %p147
        %s213 = sand.u32 %s137, 1
        %s214 = scalar_lea.sflag [#allocation3], %s213
        %s215 = sand.u32 %s137, 1
        %s216 = scalar_lea.vmem [#allocation2], %s215
        %p217 = scmp.lt.s32.totalorder %s19, 1
        %s218 = scalar_select %p217, %s19, 1
        %s219 = smul.addr %s218, 32
        %s220 = smul.addr %s219, 4
        %s221 = scalar_lea.vmem %s0, %s220
        %v223 = vld [vmem:[%s221] sm:$0xf]
        %v224 = vld [vmem:[%s221 + $0x4] sm:$0xf]
        %v225 = vld [vmem:[%s221 + $0x8] sm:$0xf]
        %v226 = vld [vmem:[%s221 + $0xc] sm:$0xf]
        %v227 = vld [vmem:[%s221 + $0x10] sm:$0xf]
        %v228 = vld [vmem:[%s221 + $0x14] sm:$0xf]
        %v229 = vld [vmem:[%s221 + $0x18] sm:$0xf]
        %v230 = vld [vmem:[%s221 + $0x1c] sm:$0xf]
        %v231 = vld [vmem:[%s221 + $0x20] sm:$0xf]
        %v232 = vld [vmem:[%s221 + $0x24] sm:$0xf]
        %v233 = vld [vmem:[%s221 + $0x28] sm:$0xf]
        %v234 = vld [vmem:[%s221 + $0x2c] sm:$0xf]
        %v235 = vld [vmem:[%s221 + $0x30] sm:$0xf]
        %v236 = vld [vmem:[%s221 + $0x34] sm:$0xf]
        %v237 = vld [vmem:[%s221 + $0x38] sm:$0xf]
        %v238 = vld [vmem:[%s221 + $0x3c] sm:$0xf]
        %v239 = vld [vmem:[%s221 + $0x40] sm:$0xf]
        %v240 = vld [vmem:[%s221 + $0x44] sm:$0xf]
        %v241 = vld [vmem:[%s221 + $0x48] sm:$0xf]
        %v242 = vld [vmem:[%s221 + $0x4c] sm:$0xf]
        %v243 = vld [vmem:[%s221 + $0x50] sm:$0xf]
        %v244 = vld [vmem:[%s221 + $0x54] sm:$0xf]
        %v245 = vld [vmem:[%s221 + $0x58] sm:$0xf]
        %v246 = vld [vmem:[%s221 + $0x5c] sm:$0xf]
        %v247 = vld [vmem:[%s221 + $0x60] sm:$0xf]
        %v248 = vld [vmem:[%s221 + $0x64] sm:$0xf]
        %v249 = vld [vmem:[%s221 + $0x68] sm:$0xf]
        %v250 = vld [vmem:[%s221 + $0x6c] sm:$0xf]
        %v251 = vld [vmem:[%s221 + $0x70] sm:$0xf]
        %v252 = vld [vmem:[%s221 + $0x74] sm:$0xf]
        %v253 = vld [vmem:[%s221 + $0x78] sm:$0xf]
        %v254 = vld [vmem:[%s221 + $0x7c] sm:$0xf]
        %v255 = vld [vmem:[%s1] sm:$0xf]
        %v256 = vld [vmem:[%s1 + $0x4] sm:$0xf]
        %v257 = vld [vmem:[%s1 + $0x8] sm:$0xf]
        %v258 = vld [vmem:[%s1 + $0xc] sm:$0xf]
        %v259 = vld [vmem:[%s1 + $0x10] sm:$0x3]
        %v260 = vld [vmem:[%s2] sm:$0x1]
        %v262 = vlaneseq
        %v263 = vshrl.u32 %v262, 7
        %v264 = vsub.s32 0, %v263
        %v265 = vrot.slane %v260, %v264
        %v299 = vunpack.c.l.b16 %v223
        %v300 = vunpack.c.l.b16 %v224
        %v301 = vunpack.c.l.b16 %v225
        %v302 = vunpack.c.l.b16 %v226
        %v303 = vunpack.c.l.b16 %v227
        %v304 = vunpack.c.l.b16 %v228
        %v305 = vunpack.c.l.b16 %v229
        %v306 = vunpack.c.l.b16 %v230
        %v307 = vunpack.c.l.b16 %v231
        %v308 = vunpack.c.l.b16 %v232
        %v309 = vunpack.c.l.b16 %v233
        %v310 = vunpack.c.l.b16 %v234
        %v311 = vunpack.c.l.b16 %v235
        %v312 = vunpack.c.l.b16 %v236
        %v313 = vunpack.c.l.b16 %v237
        %v314 = vunpack.c.l.b16 %v238
        %v315 = vunpack.c.l.b16 %v239
        %v316 = vunpack.c.l.b16 %v240
        %v317 = vunpack.c.l.b16 %v241
        %v318 = vunpack.c.l.b16 %v242
        %v319 = vunpack.c.l.b16 %v243
        %v320 = vunpack.c.l.b16 %v244
        %v321 = vunpack.c.l.b16 %v245
        %v322 = vunpack.c.l.b16 %v246
        %v323 = vunpack.c.l.b16 %v247
        %v324 = vunpack.c.l.b16 %v248
        %v325 = vunpack.c.l.b16 %v249
        %v326 = vunpack.c.l.b16 %v250
        %v327 = vunpack.c.l.b16 %v251
        %v328 = vunpack.c.l.b16 %v252
        %v329 = vunpack.c.l.b16 %v253
        %v330 = vunpack.c.l.b16 %v254
        %v331 = vpack.c.b16 %v300, %v299
        %v332 = vpack.c.b16 %v302, %v301
        %v333 = vpack.c.b16 %v304, %v303
        %v334 = vpack.c.b16 %v306, %v305
        %v335 = vpack.c.b16 %v308, %v307
        %v336 = vpack.c.b16 %v310, %v309
        %v337 = vpack.c.b16 %v312, %v311
        %v338 = vpack.c.b16 %v314, %v313
        %v339 = vpack.c.b16 %v316, %v315
        %v340 = vpack.c.b16 %v318, %v317
        %v341 = vpack.c.b16 %v320, %v319
        %v342 = vpack.c.b16 %v322, %v321
        %v343 = vpack.c.b16 %v324, %v323
        %v344 = vpack.c.b16 %v326, %v325
        %v345 = vpack.c.b16 %v328, %v327
        %v346 = vpack.c.b16 %v330, %v329
        %v352 = vunpack.c.l.b16 %v255
        %v353 = vunpack.c.l.b16 %v256
        %v354 = vunpack.c.l.b16 %v257
        %v355 = vunpack.c.l.b16 %v258
        %v356 = vunpack.c.l.b16 %v259
        %v357 = vpack.c.b16 %v353, %v352
        %v358 = vpack.c.b16 %v355, %v354
        %v359 = vpack.c.b16 %v356, %v356
        %vm362 = vcmask 293888
        %v364 = vsel %vm362, %v331, 0
        %v367 = vsel %vm362, %v332, 0
        %v370 = vsel %vm362, %v333, 0
        %v373 = vsel %vm362, %v334, 0
        %v376 = vsel %vm362, %v335, 0
        %v379 = vsel %vm362, %v336, 0
        %v382 = vsel %vm362, %v337, 0
        %v385 = vsel %vm362, %v338, 0
        %v388 = vsel %vm362, %v339, 0
        %v391 = vsel %vm362, %v340, 0
        %v394 = vsel %vm362, %v341, 0
        %v397 = vsel %vm362, %v342, 0
        %v400 = vsel %vm362, %v343, 0
        %v403 = vsel %vm362, %v344, 0
        %v406 = vsel %vm362, %v345, 0
        %v409 = vsel %vm362, %v346, 0
        %vm411 = vcmask 1041408
        %v413 = vsel %vm411, %v359, 0
        %415 = vmatprep.subr.bf16.mxu0 0
        %416 = vmatpush1.bf16.msra.mxu0 0
        %417 = vmatprep.subr.bf16.mxu0 0
        %418 = vmatpush1.bf16.msra.mxu0 0
        %419 = vmatprep.subr.bf16.mxu0 0
        %420 = vmatpush1.bf16.msra.mxu0 0
        %421 = vmatprep.subr.bf16.mxu0 0
        %422 = vmatpush1.bf16.msra.mxu0 0
        %423 = vmatprep.subr.bf16.mxu0 0
        %424 = vmatpush1.bf16.msra.mxu0 0
        %425 = vmatprep.subr.bf16.mxu0 0
        %426 = vmatpush1.bf16.msra.mxu0 %v413
        %427 = vmatprep.subr.bf16.mxu0 0
        %428 = vmatpush1.bf16.msra.mxu0 %v358
        %429 = vmatprep.subr.bf16.mxu0 0
        %430 = vmatpush1.bf16.msra.mxu0 %v357
        %431 = vmatprep.subr.bf16.mxu0 0
        %432 = vmatpush2.bf16.msra.mxu0 0
        %433 = vmatprep.subr.bf16.mxu0 0
        %434 = vmatpush2.bf16.msra.mxu0 0
        %435 = vmatprep.subr.bf16.mxu0 0
        %436 = vmatpush2.bf16.msra.mxu0 0
        %437 = vmatprep.subr.bf16.mxu0 0
        %438 = vmatpush2.bf16.msra.mxu0 0
        %439 = vmatprep.subr.bf16.mxu0 0
        %440 = vmatpush2.bf16.msra.mxu0 0
        %441 = vmatprep.subr.bf16.mxu0 0
        %442 = vmatpush2.bf16.msra.mxu0 0
        %443 = vmatprep.subr.bf16.mxu0 0
        %444 = vmatpush2.bf16.msra.mxu0 0
        %445 = vmatprep.subr.bf16.mxu0 0
        %446 = vmatpush2.bf16.msra.mxu0 0
        %447 = vmatprep.mubr.bf16.mxu0 0
        %448 = vmatmul.mubr.bf16.gmra.mxu0 %v364
        %v449 = vpop.f32.mrf.mxu0
        %v450 = vadd.f32 %v265, %v449
        %v451 = vpop.f32.mrf.mxu0
        %v452 = vpop.f32.mrf.mxu0
        %v453 = vadd.f32 %v265, %v452
        %v454 = vpop.f32.mrf.mxu0
        %455 = vmatprep.mubr.bf16.mxu0 0
        %456 = vmatmul.mubr.bf16.gmra.mxu0 %v367
        %v457 = vpop.f32.mrf.mxu0
        %v458 = vadd.f32 %v265, %v457
        %v459 = vpop.f32.mrf.mxu0
        %v460 = vpop.f32.mrf.mxu0
        %v461 = vadd.f32 %v265, %v460
        %v462 = vpop.f32.mrf.mxu0
        %463 = vmatprep.mubr.bf16.mxu0 0
        %464 = vmatmul.mubr.bf16.gmra.mxu0 %v370
        %v465 = vpop.f32.mrf.mxu0
        %v466 = vadd.f32 %v265, %v465
        %v467 = vpop.f32.mrf.mxu0
        %v468 = vpop.f32.mrf.mxu0
        %v469 = vadd.f32 %v265, %v468
        %v470 = vpop.f32.mrf.mxu0
        %471 = vmatprep.mubr.bf16.mxu0 0
        %472 = vmatmul.mubr.bf16.gmra.mxu0 %v373
        %v473 = vpop.f32.mrf.mxu0
        %v474 = vadd.f32 %v265, %v473
        %v475 = vpop.f32.mrf.mxu0
        %v476 = vpop.f32.mrf.mxu0
        %v477 = vadd.f32 %v265, %v476
        %v478 = vpop.f32.mrf.mxu0
        %479 = vmatprep.mubr.bf16.mxu0 0
        %480 = vmatmul.mubr.bf16.gmra.mxu0 %v376
        %v481 = vpop.f32.mrf.mxu0
        %v482 = vadd.f32 %v265, %v481
        %v483 = vpop.f32.mrf.mxu0
        %v484 = vpop.f32.mrf.mxu0
        %v485 = vadd.f32 %v265, %v484
        %v486 = vpop.f32.mrf.mxu0
        %487 = vmatprep.mubr.bf16.mxu0 0
        %488 = vmatmul.mubr.bf16.gmra.mxu0 %v379
        %v489 = vpop.f32.mrf.mxu0
        %v490 = vadd.f32 %v265, %v489
        %v491 = vpop.f32.mrf.mxu0
        %v492 = vpop.f32.mrf.mxu0
        %v493 = vadd.f32 %v265, %v492
        %v494 = vpop.f32.mrf.mxu0
        %495 = vmatprep.mubr.bf16.mxu0 0
        %496 = vmatmul.mubr.bf16.gmra.mxu0 %v382
        %v497 = vpop.f32.mrf.mxu0
        %v498 = vadd.f32 %v265, %v497
        %v499 = vpop.f32.mrf.mxu0
        %v500 = vpop.f32.mrf.mxu0
        %v501 = vadd.f32 %v265, %v500
        %v502 = vpop.f32.mrf.mxu0
        %503 = vmatprep.mubr.bf16.mxu0 0
        %504 = vmatmul.mubr.bf16.gmra.mxu0 %v385
        %v505 = vpop.f32.mrf.mxu0
        %v506 = vadd.f32 %v265, %v505
        %v507 = vpop.f32.mrf.mxu0
        %v508 = vpop.f32.mrf.mxu0
        %v509 = vadd.f32 %v265, %v508
        %v510 = vpop.f32.mrf.mxu0
        %511 = vmatprep.mubr.bf16.mxu0 0
        %512 = vmatmul.mubr.bf16.gmra.mxu0 %v388
        %v513 = vpop.f32.mrf.mxu0
        %v514 = vadd.f32 %v265, %v513
        %v515 = vpop.f32.mrf.mxu0
        %v516 = vpop.f32.mrf.mxu0
        %v517 = vadd.f32 %v265, %v516
        %v518 = vpop.f32.mrf.mxu0
        %519 = vmatprep.mubr.bf16.mxu0 0
        %520 = vmatmul.mubr.bf16.gmra.mxu0 %v391
        %v521 = vpop.f32.mrf.mxu0
        %v522 = vadd.f32 %v265, %v521
        %v523 = vpop.f32.mrf.mxu0
        %v524 = vpop.f32.mrf.mxu0
        %v525 = vadd.f32 %v265, %v524
        %v526 = vpop.f32.mrf.mxu0
        %527 = vmatprep.mubr.bf16.mxu0 0
        %528 = vmatmul.mubr.bf16.gmra.mxu0 %v394
        %v529 = vpop.f32.mrf.mxu0
        %v530 = vadd.f32 %v265, %v529
        %v531 = vpop.f32.mrf.mxu0
        %v532 = vpop.f32.mrf.mxu0
        %v533 = vadd.f32 %v265, %v532
        %v534 = vpop.f32.mrf.mxu0
        %535 = vmatprep.mubr.bf16.mxu0 0
        %536 = vmatmul.mubr.bf16.gmra.mxu0 %v397
        %v537 = vpop.f32.mrf.mxu0
        %v538 = vadd.f32 %v265, %v537
        %v539 = vpop.f32.mrf.mxu0
        %v540 = vpop.f32.mrf.mxu0
        %v541 = vadd.f32 %v265, %v540
        %v542 = vpop.f32.mrf.mxu0
        %543 = vmatprep.mubr.bf16.mxu0 0
        %544 = vmatmul.mubr.bf16.gmra.mxu0 %v400
        %v545 = vpop.f32.mrf.mxu0
        %v546 = vadd.f32 %v265, %v545
        %v547 = vpop.f32.mrf.mxu0
        %v548 = vpop.f32.mrf.mxu0
        %v549 = vadd.f32 %v265, %v548
        %v550 = vpop.f32.mrf.mxu0
        %551 = vmatprep.mubr.bf16.mxu0 0
        %552 = vmatmul.mubr.bf16.gmra.mxu0 %v403
        %v553 = vpop.f32.mrf.mxu0
        %v554 = vadd.f32 %v265, %v553
        %v555 = vpop.f32.mrf.mxu0
        %v556 = vpop.f32.mrf.mxu0
        %v557 = vadd.f32 %v265, %v556
        %v558 = vpop.f32.mrf.mxu0
        %559 = vmatprep.mubr.bf16.mxu0 0
        %560 = vmatmul.mubr.bf16.gmra.mxu0 %v406
        %v561 = vpop.f32.mrf.mxu0
        %v562 = vadd.f32 %v265, %v561
        %v563 = vpop.f32.mrf.mxu0
        %v564 = vpop.f32.mrf.mxu0
        %v565 = vadd.f32 %v265, %v564
        %v566 = vpop.f32.mrf.mxu0
        %567 = vmatprep.mubr.bf16.mxu0 0
        %568 = vmatmul.mubr.bf16.gmra.mxu0 %v409
        %v569 = vpop.f32.mrf.mxu0
        %v570 = vadd.f32 %v265, %v569
        %v571 = vpop.f32.mrf.mxu0
        %v572 = vpop.f32.mrf.mxu0
        %v573 = vadd.f32 %v265, %v572
        %v574 = vpop.f32.mrf.mxu0
        %575 = vdwg.mxu0
        %v576 = vmax.f32 %v450, 0.0
        %v577 = vmax.f32 %v453, 0.0
        %v578 = vmax.f32 %v458, 0.0
        %v579 = vmax.f32 %v461, 0.0
        %v580 = vmax.f32 %v466, 0.0
        %v581 = vmax.f32 %v469, 0.0
        %v582 = vmax.f32 %v474, 0.0
        %v583 = vmax.f32 %v477, 0.0
        %v584 = vmax.f32 %v482, 0.0
        %v585 = vmax.f32 %v485, 0.0
        %v586 = vmax.f32 %v490, 0.0
        %v587 = vmax.f32 %v493, 0.0
        %v588 = vmax.f32 %v498, 0.0
        %v589 = vmax.f32 %v501, 0.0
        %v590 = vmax.f32 %v506, 0.0
        %v591 = vmax.f32 %v509, 0.0
        %v592 = vmax.f32 %v514, 0.0
        %v593 = vmax.f32 %v517, 0.0
        %v594 = vmax.f32 %v522, 0.0
        %v595 = vmax.f32 %v525, 0.0
        %v596 = vmax.f32 %v530, 0.0
        %v597 = vmax.f32 %v533, 0.0
        %v598 = vmax.f32 %v538, 0.0
        %v599 = vmax.f32 %v541, 0.0
        %v600 = vmax.f32 %v546, 0.0
        %v601 = vmax.f32 %v549, 0.0
        %v602 = vmax.f32 %v554, 0.0
        %v603 = vmax.f32 %v557, 0.0
        %v604 = vmax.f32 %v562, 0.0
        %v605 = vmax.f32 %v565, 0.0
        %v606 = vmax.f32 %v570, 0.0
        %v607 = vmax.f32 %v573, 0.0
        %608 = vmatprep.subr.mxu0 0.0
        %609 = vmatpush1.msra.mxu0 %v591
        %610 = vmatprep.subr.mxu0 0.0
        %611 = vmatpush1.msra.mxu0 %v590
        %612 = vmatprep.subr.mxu0 0.0
        %613 = vmatpush1.msra.mxu0 %v589
        %614 = vmatprep.subr.mxu0 0.0
        %615 = vmatpush1.msra.mxu0 %v588
        %616 = vmatprep.subr.mxu0 0.0
        %617 = vmatpush1.msra.mxu0 %v587
        %618 = vmatprep.subr.mxu0 0.0
        %619 = vmatpush1.msra.mxu0 %v586
        %620 = vmatprep.subr.mxu0 0.0
        %621 = vmatpush1.msra.mxu0 %v585
        %622 = vmatprep.subr.mxu0 0.0
        %623 = vmatpush1.msra.mxu0 %v584
        %624 = vmatprep.subr.mxu0 0.0
        %625 = vmatpush1.msra.mxu0 %v583
        %626 = vmatprep.subr.mxu0 0.0
        %627 = vmatpush1.msra.mxu0 %v582
        %628 = vmatprep.subr.mxu0 0.0
        %629 = vmatpush1.msra.mxu0 %v581
        %630 = vmatprep.subr.mxu0 0.0
        %631 = vmatpush1.msra.mxu0 %v580
        %632 = vmatprep.subr.mxu0 0.0
        %633 = vmatpush1.msra.mxu0 %v579
        %634 = vmatprep.subr.mxu0 0.0
        %635 = vmatpush1.msra.mxu0 %v578
        %636 = vmatprep.subr.mxu0 0.0
        %637 = vmatpush1.msra.mxu0 %v577
        %638 = vmatprep.subr.mxu0 0.0
        %639 = vmatpush1.msra.mxu0 %v576
        %640 = vmatprep.subr.mxu0 0.0
        %641 = vmatpush2.msra.mxu0 %v607
        %642 = vmatprep.subr.mxu0 0.0
        %643 = vmatpush2.msra.mxu0 %v606
        %644 = vmatprep.subr.mxu0 0.0
        %645 = vmatpush2.msra.mxu0 %v605
        %646 = vmatprep.subr.mxu0 0.0
        %647 = vmatpush2.msra.mxu0 %v604
        %648 = vmatprep.subr.mxu0 0.0
        %649 = vmatpush2.msra.mxu0 %v603
        %650 = vmatprep.subr.mxu0 0.0
        %651 = vmatpush2.msra.mxu0 %v602
        %652 = vmatprep.subr.mxu0 0.0
        %653 = vmatpush2.msra.mxu0 %v601
        %654 = vmatprep.subr.mxu0 0.0
        %655 = vmatpush2.msra.mxu0 %v600
        %656 = vmatprep.subr.mxu0 0.0
        %657 = vmatpush2.msra.mxu0 %v599
        %658 = vmatprep.subr.mxu0 0.0
        %659 = vmatpush2.msra.mxu0 %v598
        %660 = vmatprep.subr.mxu0 0.0
        %661 = vmatpush2.msra.mxu0 %v597
        %662 = vmatprep.subr.mxu0 0.0
        %663 = vmatpush2.msra.mxu0 %v596
        %664 = vmatprep.subr.mxu0 0.0
        %665 = vmatpush2.msra.mxu0 %v595
        %666 = vmatprep.subr.mxu0 0.0
        %667 = vmatpush2.msra.mxu0 %v594
        %668 = vmatprep.subr.mxu0 0.0
        %669 = vmatpush2.msra.mxu0 %v593
        %670 = vmatprep.subr.mxu0 0.0
        %671 = vmatpush2.msra.mxu0 %v592
        %672 = vmatprep.mubr.f32.mxu0 0.00390625
        %673 = vmatmul.mubr.f32.gmra.mxu0 0.00390625
        %v674 = vpop.f32.mrf.mxu0
        %v675 = vadd.f32 0.0, %v674
        %v676 = vpop.f32.mrf.mxu0
        %677 = vdwg.mxu0
        %v678 = vpack.c.bf16 %v675, %v675
        %v679 = vld [vmem:[%s3] sm:$0xf]
        %v680 = vld [vmem:[%s3 + $0x4] sm:$0xf]
        %v681 = vld [vmem:[%s3 + $0x8] sm:$0xf]
        %v682 = vld [vmem:[%s3 + $0xc] sm:$0xf]
        %v683 = vld [vmem:[%s4] sm:$0x1]
        %v688 = vunpack.c.l.b16 %v679
        %v689 = vunpack.c.l.b16 %v680
        %v690 = vunpack.c.l.b16 %v681
        %v691 = vunpack.c.l.b16 %v682
        %v692 = vpack.c.b16 %v689, %v688
        %v693 = vpack.c.b16 %v691, %v690
        %vm696 = vcmask 261120
        %v698 = vsel %vm696, %v678, 0
        %700 = vmatprep.subr.bf16.mxu0 0
        %701 = vmatpush1.bf16.msra.mxu0 0
        %702 = vmatprep.subr.bf16.mxu0 0
        %703 = vmatpush1.bf16.msra.mxu0 0
        %704 = vmatprep.subr.bf16.mxu0 0
        %705 = vmatpush1.bf16.msra.mxu0 0
        %706 = vmatprep.subr.bf16.mxu0 0
        %707 = vmatpush1.bf16.msra.mxu0 0
        %708 = vmatprep.subr.bf16.mxu0 0
        %709 = vmatpush1.bf16.msra.mxu0 0
        %710 = vmatprep.subr.bf16.mxu0 0
        %711 = vmatpush1.bf16.msra.mxu0 0
        %712 = vmatprep.subr.bf16.mxu0 0
        %713 = vmatpush1.bf16.msra.mxu0 %v693
        %714 = vmatprep.subr.bf16.mxu0 0
        %715 = vmatpush1.bf16.msra.mxu0 %v692
        %716 = vmatprep.subr.bf16.mxu0 0
        %717 = vmatpush2.bf16.msra.mxu0 0
        %718 = vmatprep.subr.bf16.mxu0 0
        %719 = vmatpush2.bf16.msra.mxu0 0
        %720 = vmatprep.subr.bf16.mxu0 0
        %721 = vmatpush2.bf16.msra.mxu0 0
        %722 = vmatprep.subr.bf16.mxu0 0
        %723 = vmatpush2.bf16.msra.mxu0 0
        %724 = vmatprep.subr.bf16.mxu0 0
        %725 = vmatpush2.bf16.msra.mxu0 0
        %726 = vmatprep.subr.bf16.mxu0 0
        %727 = vmatpush2.bf16.msra.mxu0 0
        %728 = vmatprep.subr.bf16.mxu0 0
        %729 = vmatpush2.bf16.msra.mxu0 0
        %730 = vmatprep.subr.bf16.mxu0 0
        %731 = vmatpush2.bf16.msra.mxu0 0
        %732 = vmatprep.mubr.bf16.mxu0 0
        %733 = vmatmul.mubr.bf16.gmra.mxu0 %v698
        %v734 = vpop.f32.mrf.mxu0
        %v735 = vadd.f32 %v683, %v734
        %v736 = vpop.f32.mrf.mxu0
        %v737 = vpop.f32.mrf.mxu0
        %v738 = vpop.f32.mrf.mxu0
        %739 = vdwg.mxu0
        %740 = vst [vmem:[%s216] sm:$0x1] %v735
        %s741 = sand.u32 %s137, 1
        %s742 = scalar_lea.sflag [#allocation3], %s741
        %s743 = sand.u32 %s137, 1
        %s744 = scalar_lea.vmem [#allocation2], %s743
        // Predicated region
        $region41: #{continual_learner_forward.1} parent=39 // pred_check
          %p745 = pneg %p147
        $region42: #{continual_learner_forward.1} parent=39 // pred_check_branch
          %747 = sbr.rel (%p745) target = $region44
        $region43: #{continual_learner_forward.1} parent=39 // pred_region
          %s749 = ssub.s32 16, 16
          %750 = vsyncadd %s742, %s749
          %s751 = smul.addr %s19, 16
          %s752 = scalar_lea.hbm %s5, %s751
          %s754 = sshll.u32 %s744, 4
          %s755 = int_to_ptr.vmem [resolvable:$true] %s754
          %757 = dma.vmem_to_hbm [thread:$0]  %s755, 16, %s752, %s742
        $region44: #{continual_learner_forward.1} parent=39 // pred_fallthru
          _
      $region40: #{continual_learner_forward.1} parent=5 // pred_fallthru
        _
      %p758 = scmp.le.s32.totalorder 2, %s14
      // Predicated region
      $region45: #{continual_learner_forward.1} parent=5 // pred_check
        %p759 = pneg %p758
      $region46: #{continual_learner_forward.1} parent=5 // pred_check_branch
        %761 = sbr.rel (%p759) target = $region48
      $region47: #{continual_learner_forward.1} parent=5 // pred_region
        %s762 = ssub.s32 %s14, 2
        // Predicated region
        $region49: #{continual_learner_forward.1} parent=47 // pred_check
          %p763 = pneg %p153
        $region50: #{continual_learner_forward.1} parent=47 // pred_check_branch
          %765 = sbr.rel (%p763) target = $region52
        $region51: #{continual_learner_forward.1} parent=47 // pred_region
          %s766 = sand.u32 %s138, 1
          %s767 = scalar_lea.sflag [#allocation3], %s766
          %s768 = sand.u32 %s138, 1
          %s769 = scalar_lea.vmem [#allocation2], %s768
          %770 = dma.done %s767, 16
        $region52: #{continual_learner_forward.1} parent=47 // pred_fallthru
          _
      $region48: #{continual_learner_forward.1} parent=5 // pred_fallthru
        _
    $region6: #{continual_learner_forward.1} parent=1 // loop_footer
      %s18 = sadd.s32 1, %s14
    $region7: #{continual_learner_forward.1} parent=1 // loop_footer_branch
      %13 = sbr.rel target = $region3
    $region8: #{continual_learner_forward.1} parent=1 // loop_exit
      _
    %771 = vsyncpa [#allocation3], 1
    %s772 = scalar_lea.sflag [#allocation3], 1
    %773 = vsyncpa %s772, 1

</llo_original>
